<compile_context>
chip_gen: v7x
topology: tpu7x:2x2x1
jax: 0.10.0
libtpu: 0.0.40
codegen_flags: <defaults>
</compile_context>

<pallas_src>
import jax
import jax.numpy as jnp
from jax import lax
from jax.experimental import pallas as pl
from jax.experimental.pallas import tpu as pltpu


def _round_up(x, m):
    return (x + m - 1) // m * m


def _gated_attention_kernel(x_ref, w_ref, s_ref, b_ref, o_ref):
    # x_ref: (TM, Dp)   packed rows (`pack` original rows per packed row)
    # w_ref: (Dp, Dp)   block-diagonal copies of the untransposed (out, in) weight
    # s_ref: (Dp, Dp)   block-diagonal ones (segmented-sum / broadcast matrix)
    # b_ref: (1,  Dp)   bias tiled `pack` times (f32)
    # w_ref/s_ref dtype selects the MXU operand precision (bf16 by default).
    x = x_ref[...]
    mm_dtype = w_ref.dtype

    # Linear on the untransposed (out, in) weight: contract the lane dims
    # (x @ W_block^T), f32 accumulation on the MXU.
    logits = lax.dot_general(
        x.astype(mm_dtype), w_ref[...],
        dimension_numbers=(((1,), (1,)), ((), ())),
        preferred_element_type=jnp.float32)
    logits = logits + b_ref[...]

    # Segmented, numerically-stable softmax along the lane axis.
    # The full 128-lane row max is >= every D-lane group max, so exp args are
    # <= 0 and each group's softmax is unchanged.  (A group trailing the row max
    # by >~88 would underflow; the denom clamp keeps that finite rather than NaN.)
    m = jnp.max(logits, axis=-1, keepdims=True)
    e = jnp.exp(logits - m)
    # Per-group sum broadcast back to every lane of its group (one MXU matmul).
    denom = jnp.dot(e.astype(mm_dtype), s_ref[...],
                    preferred_element_type=jnp.float32)
    attn = e * pl.reciprocal(jnp.maximum(denom, 1e-30), approx=True)

    # Gate the inputs.
    o_ref[...] = (x.astype(jnp.float32) * attn).astype(o_ref.dtype)


def _gated_attention_impl(x, weight, bias, *, block_rows=2048, mxu_bf16=True):
    """x: (..., D); weight: (D, D) PyTorch-style (out, in); bias: (D,)."""
    orig_shape = x.shape
    D = orig_shape[-1]
    x2 = x.reshape(-1, D)
    M = x2.shape[0]

    # Lane-packing factor so the kernel's last dim fills a 128-lane vreg.
    pack = 128 // D if (D < 128 and 128 % D == 0) else 1
    Dp = pack * D

    # Pad only to a multiple of `pack` rows (required by the packing reshape);
    # this is a no-op whenever pack | M.  The grid handles the partial last
    # row-tile itself, so there is no padding to a multiple of tm and no extra
    # wrapper-side HBM pass.
    M_pack = _round_up(M, pack)
    if M_pack != M:
        x2 = jnp.pad(x2, ((0, M_pack - M), (0, 0)))
    Mp = M_pack // pack
    xp = x2.reshape(Mp, Dp)   # row-major: `pack` consecutive rows per packed row

    # Row tile (in packed rows): multiple of 16 sublanes (bf16-friendly), capped
    # at ~Mp/2 so the grid has >= 2 steps where possible and both of v7x's
    # TensorCores get work under dimension_semantics=("parallel",).
    block_rows = _round_up(max(int(block_rows), 16), 16)
    tm = min(block_rows, _round_up(pl.cdiv(Mp, 2), 16))
    grid = (pl.cdiv(Mp, tm),)

    f32 = jnp.float32
    mm_dtype = jnp.bfloat16 if mxu_bf16 else f32
    eye_p = jnp.eye(pack, dtype=f32)
    w_block = jnp.kron(eye_p, weight.astype(f32)).astype(mm_dtype)   # (Dp, Dp)
    seg = jnp.kron(eye_p, jnp.ones((D, D), f32)).astype(mm_dtype)    # (Dp, Dp), exact in bf16
    b_pack = jnp.tile(bias.astype(f32), pack).reshape(1, Dp)         # (1, Dp)

    x_bytes = jnp.dtype(x.dtype).itemsize
    mm_bytes = jnp.dtype(mm_dtype).itemsize
    cost = pl.CostEstimate(
        flops=4 * Mp * Dp * Dp,                   # logits matmul + segmented sum
        transcendentals=Mp * Dp,                  # exp
        bytes_accessed=x_bytes * 2 * Mp * Dp + mm_bytes * 2 * Dp * Dp + 4 * Dp)

    out = pl.pallas_call(
        _gated_attention_kernel,
        out_shape=jax.ShapeDtypeStruct((Mp, Dp), x.dtype),
        grid_spec=pltpu.PrefetchScalarGridSpec(
            num_scalar_prefetch=0,
            grid=grid,
            in_specs=[
                pl.BlockSpec((tm, Dp), lambda i: (i, 0)),   # x rows (pipelined)
                pl.BlockSpec((Dp, Dp), lambda i: (0, 0)),   # weight (resident)
                pl.BlockSpec((Dp, Dp), lambda i: (0, 0)),   # segment-sum (resident)
                pl.BlockSpec((1, Dp), lambda i: (0, 0)),    # bias (resident)
            ],
            out_specs=pl.BlockSpec((tm, Dp), lambda i: (i, 0)),
        ),
        compiler_params=pltpu.CompilerParams(
            dimension_semantics=("parallel",),
            vmem_limit_bytes=48 * 1024 * 1024),
        cost_estimate=cost,
    )(xp, w_block, seg, b_pack)

    out = out.reshape(M_pack, D)
    if M_pack != M:
        out = out[:M]
    return out.reshape(orig_shape)


gated_attention = jax.jit(_gated_attention_impl,
                          static_argnames=("block_rows", "mxu_bf16"))


if __name__ == "__main__":
    key = jax.random.PRNGKey(0)
    batch, seq, in_size = 2, 8, 32   # matches GatedAttention(d1) usage in MixerTF_Block

    kx, kw, kb = jax.random.split(key, 3)
    x = jax.random.normal(kx, (batch, seq, in_size), dtype=jnp.float32)
    # Deterministic Linear params (synthetic init, PyTorch-like uniform scale).
    bound = 1.0 / (in_size ** 0.5)
    weight = jax.random.uniform(kw, (in_size, in_size),
                                minval=-bound, maxval=bound, dtype=jnp.float32)
    bias = jax.random.uniform(kb, (in_size,),
                              minval=-bound, maxval=bound, dtype=jnp.float32)

    def ref_fn(xv):
        logits = xv @ weight.T + bias
        return xv * jax.nn.softmax(logits, axis=-1)

    # Check 1: module-consistent small shape (bf16 MXU operands, f32 accumulate).
    out = jax.block_until_ready(gated_attention(x, weight, bias))
    assert jnp.allclose(out, ref_fn(x), atol=2e-3, rtol=2e-2), "mismatch (check 1)"

    # Check 2: multi-tile grid + partial last block + row-padding path.
    x_big = jax.random.normal(jax.random.PRNGKey(1), (3, 50, in_size),
                              dtype=jnp.float32)
    out_big = jax.block_until_ready(
        gated_attention(x_big, weight, bias, block_rows=16))
    assert jnp.allclose(out_big, ref_fn(x_big), atol=2e-3, rtol=2e-2), \
        "mismatch (check 2)"

    # Check 3: f32 MXU path still compiles and is tighter.
    out_f32 = jax.block_until_ready(
        gated_attention(x, weight, bias, mxu_bf16=False))
    assert jnp.allclose(out_f32, ref_fn(x), atol=1e-3, rtol=1e-2), \
        "mismatch (check 3)"

    print("KERNEL_OK")
</pallas_src>

<mosaic_0001>
module attributes {stable_mosaic.version = 11 : i64} {
  func.func @_gated_attention_kernel(%arg0: i32, %arg1: memref<16x128xf32, #tpu.memory_space<vmem>>, %arg2: memref<128x128xbf16, #tpu.memory_space<vmem>>, %arg3: memref<128x128xbf16, #tpu.memory_space<vmem>>, %arg4: memref<1x128xf32, #tpu.memory_space<vmem>>, %arg5: memref<16x128xf32, #tpu.memory_space<vmem>>) attributes {dimension_semantics = [#tpu.dimension_semantics<parallel>], iteration_bounds = array<i64: 1>, scalar_prefetch = 0 : i64, scratch_operands = 0 : i64, tpu.core_type = #tpu.core_type<tc>, window_params = [{transform_indices = @transform_0, window_bounds = array<i64: 16, 128>}, {pipeline_mode = #tpu.pipeline_mode<synchronous>, transform_indices = @transform_1, window_bounds = array<i64: 128, 128>}, {pipeline_mode = #tpu.pipeline_mode<synchronous>, transform_indices = @transform_2, window_bounds = array<i64: 128, 128>}, {pipeline_mode = #tpu.pipeline_mode<synchronous>, transform_indices = @transform_3, window_bounds = array<i64: 1, 128>}, {transform_indices = @transform_4, window_bounds = array<i64: 16, 128>}]} {
    %c0 = arith.constant 0 : index
    %c0_0 = arith.constant 0 : index
    %0 = vector.load %arg1[%c0, %c0_0] : memref<16x128xf32, #tpu.memory_space<vmem>>, vector<16x128xf32>
    %1 = arith.truncf %0 : vector<16x128xf32> to vector<16x128xbf16>
    %c0_1 = arith.constant 0 : index
    %c0_2 = arith.constant 0 : index
    %2 = vector.load %arg2[%c0_1, %c0_2] : memref<128x128xbf16, #tpu.memory_space<vmem>>, vector<128x128xbf16>
    %cst = arith.constant dense<0.000000e+00> : vector<16x128xf32>
    %3 = tpu.matmul %1, %2, %cst {dimension_numbers = #tpu.dot_dimension_numbers<[1], [1], [0], [0], [0, 0, 1, 0], [], []>} : vector<16x128xbf16>, vector<128x128xbf16>, vector<16x128xf32> -> vector<16x128xf32>
    %c0_3 = arith.constant 0 : index
    %c0_4 = arith.constant 0 : index
    %4 = vector.load %arg4[%c0_3, %c0_4] : memref<1x128xf32, #tpu.memory_space<vmem>>, vector<1x128xf32>
    %5 = vector.broadcast %4 : vector<1x128xf32> to vector<16x128xf32>
    %6 = arith.addf %3, %5 : vector<16x128xf32>
    %cst_5 = arith.constant dense<0xFF800000> : vector<16xf32>
    %7 = vector.multi_reduction <maximumf>, %6, %cst_5 [1] : vector<16x128xf32> to vector<16xf32>
    %8 = vector.shape_cast %7 : vector<16xf32> to vector<16x1xf32>
    %9 = vector.broadcast %8 : vector<16x1xf32> to vector<16x128xf32>
    %10 = arith.subf %6, %9 : vector<16x128xf32>
    %11 = math.exp %10 : vector<16x128xf32>
    %12 = arith.truncf %11 : vector<16x128xf32> to vector<16x128xbf16>
    %c0_6 = arith.constant 0 : index
    %c0_7 = arith.constant 0 : index
    %13 = vector.load %arg3[%c0_6, %c0_7] : memref<128x128xbf16, #tpu.memory_space<vmem>>, vector<128x128xbf16>
    %cst_8 = arith.constant dense<0.000000e+00> : vector<16x128xf32>
    %14 = tpu.matmul %12, %13, %cst_8 {dimension_numbers = #tpu.dot_dimension_numbers<[1], [0], [0], [1], [0, 0, 1, 1], [], []>} : vector<16x128xbf16>, vector<128x128xbf16>, vector<16x128xf32> -> vector<16x128xf32>
    %cst_9 = arith.constant 1.000000e-30 : f32
    %15 = vector.broadcast %cst_9 : f32 to vector<16x128xf32>
    %16 = arith.maximumf %14, %15 : vector<16x128xf32>
    %17 = tpu.reciprocal %16 {approx = true} : vector<16x128xf32> -> vector<16x128xf32>
    %18 = arith.mulf %11, %17 : vector<16x128xf32>
    %19 = arith.mulf %0, %18 : vector<16x128xf32>
    %c0_10 = arith.constant 0 : index
    %c0_11 = arith.constant 0 : index
    %20 = vector.load %arg5[%c0_10, %c0_11] : memref<16x128xf32, #tpu.memory_space<vmem>>, vector<16x128xf32>
    tpu.vector_store %arg5[%c0_10, %c0_11], %19 {strides = array<i32>} : memref<16x128xf32, #tpu.memory_space<vmem>>, vector<16x128xf32>,
    return
  }
  func.func @transform_0(%arg0: i32) -> (i32, i32) {
    %c0_i32 = arith.constant 0 : i32
    %c0_i32_0 = arith.constant 0 : i32
    return %arg0, %c0_i32 : i32, i32
  }
  func.func @transform_1(%arg0: i32) -> (i32, i32) {
    %c0_i32 = arith.constant 0 : i32
    %c0_i32_0 = arith.constant 0 : i32
    %c0_i32_1 = arith.constant 0 : i32
    return %c0_i32, %c0_i32_0 : i32, i32
  }
  func.func @transform_2(%arg0: i32) -> (i32, i32) {
    %c0_i32 = arith.constant 0 : i32
    %c0_i32_0 = arith.constant 0 : i32
    %c0_i32_1 = arith.constant 0 : i32
    return %c0_i32, %c0_i32_0 : i32, i32
  }
  func.func @transform_3(%arg0: i32) -> (i32, i32) {
    %c0_i32 = arith.constant 0 : i32
    %c0_i32_0 = arith.constant 0 : i32
    %c0_i32_1 = arith.constant 0 : i32
    return %c0_i32, %c0_i32_0 : i32, i32
  }
  func.func @transform_4(%arg0: i32) -> (i32, i32) {
    %c0_i32 = arith.constant 0 : i32
    %c0_i32_0 = arith.constant 0 : i32
    return %arg0, %c0_i32 : i32, i32
  }
}

</mosaic_0001>

<llo_original>
// kernel: tile.8
$region0: #{tile.8}
  #allocation0 [shape = 's32[1]{0}', space=sflag, size = 0x4, scoped, tag = 'scoped memory for tile.8']
  %s0 = inlined_call_operand.vmem [shape: f32[32], index: 0, kind: input, shape index: {}]
  %s1 = inlined_call_operand.vmem [shape: f32[4,32], index: 1, kind: output, shape index: {}]
  // Predicated region
  $region2: #{tile.8} parent=0 // pred_check
    _
  $region3: #{tile.8} parent=0 // pred_check_branch
    %3 = sbr.rel (0) target = $region5
  $region4: #{tile.8} parent=0 // pred_region
    _
  $region5: #{tile.8} parent=0 // pred_fallthru
    _
  %v4 = vld [vmem:[%s0] ss:$0 sm:$0xff]
  %5 = vst [vmem:[%s1] sm:$0xf] %v4

// kernel: tile.9
$region0: #{tile.9}
  %s0 = inlined_call_operand.vmem [shape: f32[4,32], index: 0, kind: input, shape index: {}]
  %s1 = inlined_call_operand.vmem [shape: f32[1,128], index: 1, kind: output, shape index: {}]
  $region1: #{tile.9} parent=0
    #allocation0 [shape = 'u8[4096]{0}', space=vmem, size = 0x1000, scoped, tag = 'scoped mem for output reshape']
    #allocation1 [shape = 'u8[4096]{0}', space=vmem, size = 0x1000, scoped, tag = 'scoped mem for input reshape']
    %s3 = sshllo.u32 0, 4
    %v4 = vld [vmem:[%s0] sm:%s3]
    %5 = vst [vmem:[#allocation1] sm:%s3] %v4
    %v6 = vld [vmem:[#allocation1] sm:$0x1]
    %vm7 = vcmask 261120
    %8 = vst.msk [vmem:[#allocation0] sm:$0x1] %vm7, %v6
    %s9 = scalar_lea.vmem [#allocation1], 3
    %v10 = vld [vmem:[%s9] sm:$0x1]
    %11 = vrot.lane.b32.xlu0 %v10, 96
    %v12 = vpop.permute.xlu0 %11
    %vm13 = vcmask 1048320
    %14 = vst.msk [vmem:[#allocation0] sm:$0x1] %vm13, %v12
    %s15 = scalar_lea.vmem [#allocation1], 2
    %v16 = vld [vmem:[%s15] sm:$0x1]
    %17 = vrot.lane.b32.xlu0 %v16, 64
    %v18 = vpop.permute.xlu0 %17
    %vm19 = vcmask 785920
    %20 = vst.msk [vmem:[#allocation0] sm:$0x1] %vm19, %v18
    %s21 = scalar_lea.vmem [#allocation1], 1
    %v22 = vld [vmem:[%s21] sm:$0x1]
    %23 = vrot.lane.b32.xlu0 %v22, 32
    %v24 = vpop.permute.xlu0 %23
    %vm25 = vcmask 523520
    %26 = vst.msk [vmem:[#allocation0] sm:$0x1] %vm25, %v24
    %s28 = sshllo.u32 0, 1
    %v30 = vld [vmem:[#allocation0] sm:%s28]
    %s31 = sshllo.u32 0, 1
    %32 = vst [vmem:[%s1] sm:%s31] %v30

// kernel: _gated_attention_impl.1
$region0: #{_gated_attention_impl.1}
  #allocation0 [shape = 'u32[]', space=smem, size = 0x4, offset = 0x4, fixed_abs, tag = 'smem constant byte address 0x4 - core index']
  #allocation1 [shape = 'u32[144,128]{1,0:T(1,128)}', space=vmem, size = 0x12000, scoped, tag = 'internal scratch']
  %s0 = inlined_call_operand.vmem [shape: f32[4,128], index: 0, kind: input, shape index: {}]
  %s1 = inlined_call_operand.vmem [shape: bf16[128,128], index: 1, kind: input, shape index: {}]
  %s2 = inlined_call_operand.vmem [shape: bf16[128,128], index: 2, kind: input, shape index: {}]
  %s3 = inlined_call_operand.vmem [shape: f32[1,128], index: 3, kind: input, shape index: {}]
  %s4 = inlined_call_operand.vmem [shape: f32[4,128], index: 4, kind: output, shape index: {}]
  %s5 = sld [smem:[#allocation0]]
  $region56: #{_gated_attention_impl.1} parent=0
    _
  %s7 = ssub.s32 1, %s5
  %s8 = scalar_select 0, %s7, %s5
  $region1: #{_gated_attention_impl.1} parent=0
    #allocation2 [shape = 'u8[8192]{0}', space=vmem, size = 0x2000, scoped, tag = 'output window, operand 0, single buffered']
    // Predicated region
    $region2: #{_gated_attention_impl.1} parent=1 // pred_check
      _
    $region3: #{_gated_attention_impl.1} parent=1 // pred_check_branch
      %10 = sbr.rel (0) target = $region5
    $region4: #{_gated_attention_impl.1} parent=1 // pred_region
      _
    $region5: #{_gated_attention_impl.1} parent=1 // pred_fallthru
      _
    // Predicated region
    $region6: #{_gated_attention_impl.1} parent=1 // pred_check
      _
    $region7: #{_gated_attention_impl.1} parent=1 // pred_check_branch
      %12 = sbr.rel (0) target = $region9
    $region8: #{_gated_attention_impl.1} parent=1 // pred_region
      _
    $region9: #{_gated_attention_impl.1} parent=1 // pred_fallthru
      _
    // Predicated region
    $region10: #{_gated_attention_impl.1} parent=1 // pred_check
      _
    $region11: #{_gated_attention_impl.1} parent=1 // pred_check_branch
      %14 = sbr.rel (0) target = $region13
    $region12: #{_gated_attention_impl.1} parent=1 // pred_region
      _
    $region13: #{_gated_attention_impl.1} parent=1 // pred_fallthru
      _
    // Predicated region
    $region14: #{_gated_attention_impl.1} parent=1 // pred_check
      _
    $region15: #{_gated_attention_impl.1} parent=1 // pred_check_branch
      %16 = sbr.rel (0) target = $region17
    $region16: #{_gated_attention_impl.1} parent=1 // pred_region
      _
    $region17: #{_gated_attention_impl.1} parent=1 // pred_fallthru
      _
    %v18 = vld [vmem:[%s0] sm:$0xff]
    %v19 = vld [vmem:[%s0 + $0x8] sm:$0xff]
    %v20 = vpack.c.bf16 %v19, %v18
    %v21 = vld [vmem:[%s1] sm:$0xf]
    %v22 = vld [vmem:[%s1 + $0x4] sm:$0xf]
    %v23 = vld [vmem:[%s1 + $0x8] sm:$0xf]
    %v24 = vld [vmem:[%s1 + $0xc] sm:$0xf]
    %v25 = vld [vmem:[%s1 + $0x10] sm:$0xf]
    %v26 = vld [vmem:[%s1 + $0x14] sm:$0xf]
    %v27 = vld [vmem:[%s1 + $0x18] sm:$0xf]
    %v28 = vld [vmem:[%s1 + $0x1c] sm:$0xf]
    %v29 = vld [vmem:[%s1 + $0x20] sm:$0xf]
    %v30 = vld [vmem:[%s1 + $0x24] sm:$0xf]
    %v31 = vld [vmem:[%s1 + $0x28] sm:$0xf]
    %v32 = vld [vmem:[%s1 + $0x2c] sm:$0xf]
    %v33 = vld [vmem:[%s1 + $0x30] sm:$0xf]
    %v34 = vld [vmem:[%s1 + $0x34] sm:$0xf]
    %v35 = vld [vmem:[%s1 + $0x38] sm:$0xf]
    %v36 = vld [vmem:[%s1 + $0x3c] sm:$0xf]
    %v37 = vld [vmem:[%s3] sm:$0x1]
    %v39 = vlaneseq
    %v40 = vshrl.u32 %v39, 7
    %v41 = vsub.s32 0, %v40
    %v42 = vrot.slane %v37, %v41
    %v60 = vunpack.c.l.b16 %v21
    %v61 = vunpack.c.l.b16 %v22
    %v62 = vunpack.c.l.b16 %v23
    %v63 = vunpack.c.l.b16 %v24
    %v64 = vunpack.c.l.b16 %v25
    %v65 = vunpack.c.l.b16 %v26
    %v66 = vunpack.c.l.b16 %v27
    %v67 = vunpack.c.l.b16 %v28
    %v68 = vunpack.c.l.b16 %v29
    %v69 = vunpack.c.l.b16 %v30
    %v70 = vunpack.c.l.b16 %v31
    %v71 = vunpack.c.l.b16 %v32
    %v72 = vunpack.c.l.b16 %v33
    %v73 = vunpack.c.l.b16 %v34
    %v74 = vunpack.c.l.b16 %v35
    %v75 = vunpack.c.l.b16 %v36
    %v76 = vpack.c.b16 %v61, %v60
    %v77 = vpack.c.b16 %v63, %v62
    %v78 = vpack.c.b16 %v65, %v64
    %v79 = vpack.c.b16 %v67, %v66
    %v80 = vpack.c.b16 %v69, %v68
    %v81 = vpack.c.b16 %v71, %v70
    %v82 = vpack.c.b16 %v73, %v72
    %v83 = vpack.c.b16 %v75, %v74
    %92 = vmatprep.subr.bf16.mxu0 0
    %93 = vmatpush1.bf16.xpose.msra.mxu0 %v76
    %94 = vmatprep.subr.bf16.mxu0 0
    %95 = vmatpush1.bf16.xpose.msra.mxu0 %v77
    %96 = vmatprep.subr.bf16.mxu0 0
    %97 = vmatpush1.bf16.xpose.msra.mxu0 %v78
    %98 = vmatprep.subr.bf16.mxu0 0
    %99 = vmatpush1.bf16.xpose.msra.mxu0 %v79
    %100 = vmatprep.subr.bf16.mxu0 0
    %101 = vmatpush1.bf16.xpose.msra.mxu0 %v80
    %102 = vmatprep.subr.bf16.mxu0 0
    %103 = vmatpush1.bf16.xpose.msra.mxu0 %v81
    %104 = vmatprep.subr.bf16.mxu0 0
    %105 = vmatpush1.bf16.xpose.msra.mxu0 %v82
    %106 = vmatprep.subr.bf16.mxu0 0
    %107 = vmatpush1.bf16.xpose.msra.mxu0 %v83
    %108 = vmatprep.subr.bf16.mxu0 0
    %109 = vmatpush1.bf16.xpose.msra.mxu0 0
    %110 = vmatprep.subr.bf16.mxu0 0
    %111 = vmatpush1.bf16.xpose.msra.mxu0 0
    %112 = vmatprep.subr.bf16.mxu0 0
    %113 = vmatpush1.bf16.xpose.msra.mxu0 0
    %114 = vmatprep.subr.bf16.mxu0 0
    %115 = vmatpush1.bf16.xpose.msra.mxu0 0
    %116 = vmatprep.subr.bf16.mxu0 0
    %117 = vmatpush1.bf16.xpose.msra.mxu0 0
    %118 = vmatprep.subr.bf16.mxu0 0
    %119 = vmatpush1.bf16.xpose.msra.mxu0 0
    %120 = vmatprep.subr.bf16.mxu0 0
    %121 = vmatpush1.bf16.xpose.msra.mxu0 0
    %122 = vmatprep.subr.bf16.mxu0 0
    %123 = vmatpush1.bf16.xpose.msra.mxu0 0
    %124 = vmatprep.mubr.bf16.mxu0 0
    %125 = vmatmul.mubr.bf16.gmra.mrb[0].mxu0 %v20
    %v126 = vpop.f32.mrb[0].mxu0
    %v127 = vadd.f32 %v42, %v126
    %v128 = vpop.f32.mrb[0].mxu0
    %v129 = vpop.f32.mrb[0].mxu0
    %v130 = vadd.f32 %v42, %v129
    %v131 = vpop.f32.mrb[0].mxu0
    %132 = vdwg.mxu0
    %133 = vmax.xlane.f32.xlu0 %v127
    %v134 = vpop.xlane.xlu0 %133
    %135 = vmax.xlane.f32.xlu0 %v130
    %v136 = vpop.xlane.xlu0 %135
    %v137 = vsub.f32 %v127, %v134
    %v138 = vsub.f32 %v130, %v136
    %v139 = vmul.f32 %v137, 1.442695
    %v140 = vpow.pop %v139
    %v141 = vmul.f32 %v138, 1.442695
    %v142 = vpow.pop %v141
    %v143 = vpack.c.bf16 %v142, %v140
    %v144 = vld [vmem:[%s2] sm:$0xf]
    %v145 = vld [vmem:[%s2 + $0x4] sm:$0xf]
    %v146 = vld [vmem:[%s2 + $0x8] sm:$0xf]
    %v147 = vld [vmem:[%s2 + $0xc] sm:$0xf]
    %v148 = vld [vmem:[%s2 + $0x10] sm:$0xf]
    %v149 = vld [vmem:[%s2 + $0x14] sm:$0xf]
    %v150 = vld [vmem:[%s2 + $0x18] sm:$0xf]
    %v151 = vld [vmem:[%s2 + $0x1c] sm:$0xf]
    %v152 = vld [vmem:[%s2 + $0x20] sm:$0xf]
    %v153 = vld [vmem:[%s2 + $0x24] sm:$0xf]
    %v154 = vld [vmem:[%s2 + $0x28] sm:$0xf]
    %v155 = vld [vmem:[%s2 + $0x2c] sm:$0xf]
    %v156 = vld [vmem:[%s2 + $0x30] sm:$0xf]
    %v157 = vld [vmem:[%s2 + $0x34] sm:$0xf]
    %v158 = vld [vmem:[%s2 + $0x38] sm:$0xf]
    %v159 = vld [vmem:[%s2 + $0x3c] sm:$0xf]
    %v176 = vunpack.c.l.b16 %v144
    %v177 = vunpack.c.l.b16 %v145
    %v178 = vunpack.c.l.b16 %v146
    %v179 = vunpack.c.l.b16 %v147
    %v180 = vunpack.c.l.b16 %v148
    %v181 = vunpack.c.l.b16 %v149
    %v182 = vunpack.c.l.b16 %v150
    %v183 = vunpack.c.l.b16 %v151
    %v184 = vunpack.c.l.b16 %v152
    %v185 = vunpack.c.l.b16 %v153
    %v186 = vunpack.c.l.b16 %v154
    %v187 = vunpack.c.l.b16 %v155
    %v188 = vunpack.c.l.b16 %v156
    %v189 = vunpack.c.l.b16 %v157
    %v190 = vunpack.c.l.b16 %v158
    %v191 = vunpack.c.l.b16 %v159
    %v192 = vpack.c.b16 %v177, %v176
    %v193 = vpack.c.b16 %v179, %v178
    %v194 = vpack.c.b16 %v181, %v180
    %v195 = vpack.c.b16 %v183, %v182
    %v196 = vpack.c.b16 %v185, %v184
    %v197 = vpack.c.b16 %v187, %v186
    %v198 = vpack.c.b16 %v189, %v188
    %v199 = vpack.c.b16 %v191, %v190
    %208 = vmatprep.subr.bf16.mxu0 0
    %209 = vmatpush1.bf16.msra.mxu0 %v192
    %210 = vmatprep.subr.bf16.mxu0 0
    %211 = vmatpush1.bf16.msra.mxu0 %v193
    %212 = vmatprep.subr.bf16.mxu0 0
    %213 = vmatpush1.bf16.msra.mxu0 %v194
    %214 = vmatprep.subr.bf16.mxu0 0
    %215 = vmatpush1.bf16.msra.mxu0 %v195
    %216 = vmatprep.subr.bf16.mxu0 0
    %217 = vmatpush1.bf16.msra.mxu0 %v196
    %218 = vmatprep.subr.bf16.mxu0 0
    %219 = vmatpush1.bf16.msra.mxu0 %v197
    %220 = vmatprep.subr.bf16.mxu0 0
    %221 = vmatpush1.bf16.msra.mxu0 %v198
    %222 = vmatprep.subr.bf16.mxu0 0
    %223 = vmatpush1.bf16.msra.mxu0 %v199
    %224 = vmatprep.subr.bf16.mxu0 0
    %225 = vmatpush1.bf16.msra.mxu0 0
    %226 = vmatprep.subr.bf16.mxu0 0
    %227 = vmatpush1.bf16.msra.mxu0 0
    %228 = vmatprep.subr.bf16.mxu0 0
    %229 = vmatpush1.bf16.msra.mxu0 0
    %230 = vmatprep.subr.bf16.mxu0 0
    %231 = vmatpush1.bf16.msra.mxu0 0
    %232 = vmatprep.subr.bf16.mxu0 0
    %233 = vmatpush1.bf16.msra.mxu0 0
    %234 = vmatprep.subr.bf16.mxu0 0
    %235 = vmatpush1.bf16.msra.mxu0 0
    %236 = vmatprep.subr.bf16.mxu0 0
    %237 = vmatpush1.bf16.msra.mxu0 0
    %238 = vmatprep.subr.bf16.mxu0 0
    %239 = vmatpush1.bf16.msra.mxu0 0
    %240 = vmatprep.mubr.bf16.mxu0 0
    %241 = vmatmul.mubr.bf16.gmra.mrb[0].mxu0 %v143
    %v242 = vpop.f32.mrb[0].mxu0
    %v243 = vadd.f32 0.0, %v242
    %v244 = vpop.f32.mrb[0].mxu0
    %v245 = vpop.f32.mrb[0].mxu0
    %v246 = vadd.f32 0.0, %v245
    %v247 = vpop.f32.mrb[0].mxu0
    %248 = vdwg.mxu0
    %v249 = vmax.f32 %v243, 1e-30
    %v250 = vmax.f32 %v246, 1e-30
    %v251 = vrcp.pop %v249
    %v252 = vrcp.pop %v250
    %v253 = vmul.f32 %v140, %v251
    %v254 = vmul.f32 %v142, %v252
    %v255 = vmul.f32 %v18, %v253
    %v256 = vmul.f32 %v19, %v254
    %257 = vst [vmem:[#allocation2] sm:$0xff] %v255
    %258 = vst [vmem:[#allocation2 + $0x8] sm:$0xff] %v256
    // Predicated region
    $region18: #{_gated_attention_impl.1} parent=1 // pred_check
      _
    $region19: #{_gated_attention_impl.1} parent=1 // pred_check_branch
      %260 = sbr.rel (0) target = $region21
    $region20: #{_gated_attention_impl.1} parent=1 // pred_region
      // Predicated region
      $region22: #{_gated_attention_impl.1} parent=20 // pred_check
        _
      $region23: #{_gated_attention_impl.1} parent=20 // pred_check_branch
        %262 = sbr.rel (0) target = $region25
      $region24: #{_gated_attention_impl.1} parent=20 // pred_region
        // Predicated region
        $region26: #{_gated_attention_impl.1} parent=24 // pred_check
          _
        $region27: #{_gated_attention_impl.1} parent=24 // pred_check_branch
          %264 = sbr.rel target = $region29
        $region28: #{_gated_attention_impl.1} parent=24 // pred_region
          // Predicated region
          $region41: #{_gated_attention_impl.1} parent=28 // pred_check
            _
          $region42: #{_gated_attention_impl.1} parent=28 // pred_check_branch
            %279 = sbr.rel (0) target = $region44
          $region43: #{_gated_attention_impl.1} parent=28 // pred_region
            loop: start=0, step=1, limit=1
            $region45: #{_gated_attention_impl.1} parent=43 // loop_pre_header
              _
            $region46: #{_gated_attention_impl.1} parent=43 // loop_header
              %s282 = sphi 0, %s286
              %p283 = scmp.ge.s32.totalorder %s282, 1
              %s287 = sphi [#allocation2], [#allocation2]
              %s288 = sphi %s4, %s4
            $region47: #{_gated_attention_impl.1} parent=43 // loop_header_branch
              %285 = sbr.rel (%p283) target = $region51
            $region48: #{_gated_attention_impl.1} parent=43 // loop_body
              %v289 = vld [vmem:[%s287] sm:$0xf]
              %290 = vst [vmem:[%s288] sm:$0xf] %v289
            $region49: #{_gated_attention_impl.1} parent=43 // loop_footer
              %s286 = sadd.s32 1, %s282
            $region50: #{_gated_attention_impl.1} parent=43 // loop_footer_branch
              %281 = sbr.rel target = $region46
            $region51: #{_gated_attention_impl.1} parent=43 // loop_exit
              _
          $region44: #{_gated_attention_impl.1} parent=28 // pred_fallthru
            _
        $region29: #{_gated_attention_impl.1} parent=24 // pred_fallthru
          _
        // Predicated region
        $region30: #{_gated_attention_impl.1} parent=24 // pred_check
          _
        $region31: #{_gated_attention_impl.1} parent=24 // pred_check_branch
          %266 = sbr.rel (0) target = $region33
        $region32: #{_gated_attention_impl.1} parent=24 // pred_region
          loop: start=0, step=1, limit=1
          $region34: #{_gated_attention_impl.1} parent=32 // loop_pre_header
            _
          $region35: #{_gated_attention_impl.1} parent=32 // loop_header
            %s269 = sphi 0, %s273
            %p270 = scmp.ge.s32.totalorder %s269, 1
            %s274 = sphi [#allocation2], [#allocation2]
            %s275 = sphi %s4, %s4
          $region36: #{_gated_attention_impl.1} parent=32 // loop_header_branch
            %272 = sbr.rel (%p270) target = $region40
          $region37: #{_gated_attention_impl.1} parent=32 // loop_body
            %v276 = vld [vmem:[%s274] sm:$0xf]
            %277 = vst [vmem:[%s275] sm:$0xf] %v276
          $region38: #{_gated_attention_impl.1} parent=32 // loop_footer
            %s273 = sadd.s32 1, %s269
          $region39: #{_gated_attention_impl.1} parent=32 // loop_footer_branch
            %268 = sbr.rel target = $region35
          $region40: #{_gated_attention_impl.1} parent=32 // loop_exit
            _
        $region33: #{_gated_attention_impl.1} parent=24 // pred_fallthru
          _
      $region25: #{_gated_attention_impl.1} parent=20 // pred_fallthru
        _
      %291 = vnop
    $region21: #{_gated_attention_impl.1} parent=1 // pred_fallthru
      _
    // Predicated region
    $region52: #{_gated_attention_impl.1} parent=1 // pred_check
      _
    $region53: #{_gated_attention_impl.1} parent=1 // pred_check_branch
      %293 = sbr.rel (0) target = $region55
    $region54: #{_gated_attention_impl.1} parent=1 // pred_region
      _
    $region55: #{_gated_attention_impl.1} parent=1 // pred_fallthru
      _

</llo_original>
